<compile_context>
chip_gen: v7x
topology: tpu7x:2x2x1
jax: 0.10.0
libtpu: 0.0.40
codegen_flags: <defaults>
</compile_context>

<pallas_src>
import functools

import jax
import jax.numpy as jnp
from jax.experimental import pallas as pl
from jax.experimental.pallas import tpu as pltpu

_LANES = 128
_TS_LADDER = (512, 256, 128, 64, 32, 16, 8)  # sublane-rows per grid step


def _sh_kernel(in_ref, out_ref, *, degree: int, inv_size: float):
    # in_ref:  (3, TS, 128)          float32 -- planes are x, y, z
    # out_ref: (degree**2, TS, 128)  out_dtype
    x = in_ref[0]
    y = in_ref[1]
    z = in_ref[2]
    if inv_size != 1.0:
        x = x * inv_size
        y = y * inv_size
        z = z * inv_size

    def st(k, v):
        out_ref[k] = v.astype(out_ref.dtype)

    # l = 0
    st(0, jnp.full_like(x, 0.28209479177387814))

    if degree > 1:
        # l = 1
        st(1, -0.48860251190291987 * y)
        st(2, 0.48860251190291987 * z)
        st(3, -0.48860251190291987 * x)

    if degree > 2:
        xx = x * x
        yy = y * y
        zz = z * z
        xy = x * y
        yz = y * z
        xz = x * z
        # l = 2
        st(4, 1.0925484305920792 * xy)
        st(5, -1.0925484305920792 * yz)
        st(6, 0.94617469575755997 * zz - 0.31539156525251999)
        st(7, -1.0925484305920792 * xz)
        st(8, 0.54627421529603959 * xx - 0.54627421529603959 * yy)

        if degree > 3:
            # l = 3
            st(9, 0.59004358992664352 * y * (-3.0 * xx + yy))
            st(10, 2.8906114426405538 * xy * z)
            st(11, 0.45704579946446572 * y * (1.0 - 5.0 * zz))
            st(12, 0.3731763325901154 * z * (5.0 * zz - 3.0))
            st(13, 0.45704579946446572 * x * (1.0 - 5.0 * zz))
            st(14, 1.4453057213202769 * z * (xx - yy))
            st(15, 0.59004358992664352 * x * (-xx + 3.0 * yy))
    # TODO(synk): degrees 5..8 of the CUDA reference are not implemented here.


def _choose_block_ts(n_tiles: int, min_ts: int) -> int:
    """Largest ladder block with <~5% padding waste and (if possible) >=2 grid steps."""
    if n_tiles <= min_ts:
        return n_tiles  # single step; block equals the full dim -> always legal
    ladder = [t for t in _TS_LADDER if t >= min_ts]
    best = ladder[-1]
    for ts in ladder:
        padded = pl.cdiv(n_tiles, ts) * ts
        if (padded - n_tiles) <= 0.05 * padded:
            best = ts
            break
    # Keep >= 2 grid steps so the "parallel" axis can shard across v7x's 2 TCs.
    while best > min_ts and pl.cdiv(n_tiles, best) < 2:
        best //= 2
    return best


def sh_encode_pallas(inputs: jax.Array, degree: int = 4, size: float = 1.0, *,
                     feature_first: bool = False, coords_first: bool = False,
                     out_dtype=jnp.float32) -> jax.Array:
    """Pallas SH encoder (forward only).

    Default: (..., 3) -> (..., degree**2), matches the PyTorch module.
    feature_first=True : returns (degree**2, ...) and skips the output transpose.
    coords_first=True  : input is already (3, ...) and skips the input transpose.
    out_dtype          : jnp.float32 (default) or jnp.bfloat16 (halves write traffic).
    """
    assert 1 <= degree <= 4, "this Pallas port implements degree in [1, 4]"
    out_features = degree ** 2

    if coords_first:
        assert inputs.shape[0] == 3, "SH encoder only supports input dim == 3"
        prefix = inputs.shape[1:]
        flat = inputs.astype(jnp.float32).reshape(3, -1)  # (3, N)
        n = flat.shape[1]
    else:
        assert inputs.shape[-1] == 3, "SH encoder only supports input dim == 3"
        prefix = inputs.shape[:-1]
        flat = inputs.astype(jnp.float32).reshape(-1, 3)  # (N, 3)
        n = flat.shape[0]

    n_tiles = max(1, pl.cdiv(n, _LANES))
    min_ts = 16 if jnp.dtype(out_dtype).itemsize < 4 else 8  # bf16: (16,128) packing
    block_ts = _choose_block_ts(n_tiles, min_ts)
    n_pad_tiles = pl.cdiv(n_tiles, block_ts) * block_ts
    n_pad = n_pad_tiles * _LANES
    grid_len = n_pad_tiles // block_ts

    # Single fused pad (+ transpose if needed) into coords-first lane-dense layout.
    if coords_first:
        coords = jnp.pad(flat, ((0, 0), (0, n_pad - n)))
    else:
        coords = jnp.pad(flat, ((0, n_pad - n), (0, 0))).T
    coords = coords.reshape(3, n_pad_tiles, _LANES)

    out = pl.pallas_call(
        functools.partial(_sh_kernel, degree=degree, inv_size=1.0 / float(size)),
        out_shape=jax.ShapeDtypeStruct((out_features, n_pad_tiles, _LANES), out_dtype),
        grid=(grid_len,),
        in_specs=[pl.BlockSpec((3, block_ts, _LANES), lambda i: (0, i, 0))],
        out_specs=pl.BlockSpec((out_features, block_ts, _LANES), lambda i: (0, i, 0)),
        compiler_params=pltpu.CompilerParams(
            dimension_semantics=("parallel",)),
    )(coords)

    out = out.reshape(out_features, n_pad)[:, :n]
    if feature_first:
        return out.reshape(out_features, *prefix)
    # Output transpose kept only to match the PyTorch (..., deg**2) API;
    # prefer feature_first=True to avoid this extra HBM pass downstream.
    return out.T.reshape(*prefix, out_features)


class SHEncoder:
    """JAX/Pallas port of the torch-ngp SHEncoder module (forward only)."""

    def __init__(self, input_dim: int = 3, degree: int = 4):
        self.degree = degree
        self.in_features = input_dim
        self.out_features = degree ** 2
        assert self.in_features == 3, "SH encoder only support input dim == 3"
        assert 0 < self.degree <= 4, \
            "this Pallas port only implements degree in [1, 4]"

    def __repr__(self):
        return (f"SHEncoder: input_dim={self.in_features}, "
                f"output_dim={self.out_features}, degree={self.degree}")

    def __call__(self, inputs: jax.Array, size: float = 1.0) -> jax.Array:
        return sh_encode_pallas(inputs, self.degree, size)


def _sh_reference(inputs: jax.Array, degree: int, size: float = 1.0) -> jax.Array:
    """Pure-JAX reference for correctness checking."""
    v = inputs.astype(jnp.float32) / jnp.float32(size)
    x, y, z = v[..., 0], v[..., 1], v[..., 2]
    xx, yy, zz = x * x, y * y, z * z
    xy, yz, xz = x * y, y * z, x * z
    cols = [jnp.full_like(x, 0.28209479177387814)]
    if degree > 1:
        cols += [-0.48860251190291987 * y,
                 0.48860251190291987 * z,
                 -0.48860251190291987 * x]
    if degree > 2:
        cols += [1.0925484305920792 * xy,
                 -1.0925484305920792 * yz,
                 0.94617469575755997 * zz - 0.31539156525251999,
                 -1.0925484305920792 * xz,
                 0.54627421529603959 * xx - 0.54627421529603959 * yy]
    if degree > 3:
        cols += [0.59004358992664352 * y * (-3.0 * xx + yy),
                 2.8906114426405538 * xy * z,
                 0.45704579946446572 * y * (1.0 - 5.0 * zz),
                 0.3731763325901154 * z * (5.0 * zz - 3.0),
                 0.45704579946446572 * x * (1.0 - 5.0 * zz),
                 1.4453057213202769 * z * (xx - yy),
                 0.59004358992664352 * x * (-xx + 3.0 * yy)]
    return jnp.stack(cols, axis=-1)


if __name__ == "__main__":
    key = jax.random.PRNGKey(0)
    # Small shape consistent with the module: (..., 3); here batch=2, seq=8.
    inputs = jax.random.normal(key, (2, 8, 3), dtype=jnp.float32)
    inputs = inputs / jnp.linalg.norm(inputs, axis=-1, keepdims=True)

    enc = SHEncoder(input_dim=3, degree=4)
    out = jax.block_until_ready(enc(inputs, size=1.0))
    assert out.shape == (2, 8, 16), out.shape
    assert out.dtype == jnp.float32, out.dtype

    ref = _sh_reference(inputs, degree=4, size=1.0)
    assert jnp.allclose(out, ref, atol=1e-5, rtol=1e-5), "mismatch vs reference"

    # Feature-first (transpose-free output) fast path.
    out_ff = jax.block_until_ready(
        sh_encode_pallas(inputs, degree=4, size=1.0, feature_first=True))
    assert out_ff.shape == (16, 2, 8), out_ff.shape
    assert jnp.allclose(jnp.moveaxis(out_ff, 0, -1), ref, atol=1e-5, rtol=1e-5)

    # Coords-first (transpose-free input) fast path.
    out_cf = jax.block_until_ready(
        sh_encode_pallas(jnp.moveaxis(inputs, -1, 0), degree=4, size=1.0,
                         coords_first=True))
    assert out_cf.shape == (2, 8, 16), out_cf.shape
    assert jnp.allclose(out_cf, ref, atol=1e-5, rtol=1e-5)

    # bf16 output path (halved write traffic); compute stays f32 in-register.
    out_bf16 = jax.block_until_ready(
        sh_encode_pallas(inputs, degree=4, size=1.0, out_dtype=jnp.bfloat16))
    assert out_bf16.dtype == jnp.bfloat16
    assert jnp.allclose(out_bf16.astype(jnp.float32), ref, atol=1e-2, rtol=1e-2)

    # Lower degree branch.
    out_d2 = jax.block_until_ready(sh_encode_pallas(inputs, degree=2, size=1.0))
    assert out_d2.shape == (2, 8, 4)
    assert jnp.allclose(out_d2, _sh_reference(inputs, degree=2), atol=1e-5, rtol=1e-5)

    # Non-trivially-sized, size != 1 case (multi-step grid, adaptive block_ts).
    big = jax.random.normal(jax.random.PRNGKey(1), (3000, 3), dtype=jnp.float32)
    out_big = jax.block_until_ready(sh_encode_pallas(big, degree=4, size=2.0))
    ref_big = _sh_reference(big, degree=4, size=2.0)
    assert jnp.allclose(out_big, ref_big, atol=1e-5, rtol=1e-5)

    print("KERNEL_OK")
</pallas_src>

<mosaic_0001>
module attributes {stable_mosaic.version = 11 : i64} {
  func.func @_sh_kernel(%arg0: i32, %arg1: memref<3x1x128xf32, #tpu.memory_space<vmem>>, %arg2: memref<16x1x128xf32, #tpu.memory_space<vmem>>) attributes {dimension_semantics = [#tpu.dimension_semantics<parallel>], iteration_bounds = array<i64: 1>, scalar_prefetch = 0 : i64, scratch_operands = 0 : i64, tpu.core_type = #tpu.core_type<tc>, window_params = [{transform_indices = @transform_0, window_bounds = array<i64: 3, 1, 128>}, {transform_indices = @transform_1, window_bounds = array<i64: 16, 1, 128>}]} {
    %c0 = arith.constant 0 : index
    %c0_0 = arith.constant 0 : index
    %c0_1 = arith.constant 0 : index
    %0 = vector.load %arg1[%c0, %c0_0, %c0_1] : memref<3x1x128xf32, #tpu.memory_space<vmem>>, vector<1x1x128xf32>
    %1 = vector.shape_cast %0 : vector<1x1x128xf32> to vector<1x128xf32>
    %c1 = arith.constant 1 : index
    %c0_2 = arith.constant 0 : index
    %c0_3 = arith.constant 0 : index
    %2 = vector.load %arg1[%c1, %c0_2, %c0_3] : memref<3x1x128xf32, #tpu.memory_space<vmem>>, vector<1x1x128xf32>
    %3 = vector.shape_cast %2 : vector<1x1x128xf32> to vector<1x128xf32>
    %c2 = arith.constant 2 : index
    %c0_4 = arith.constant 0 : index
    %c0_5 = arith.constant 0 : index
    %4 = vector.load %arg1[%c2, %c0_4, %c0_5] : memref<3x1x128xf32, #tpu.memory_space<vmem>>, vector<1x1x128xf32>
    %5 = vector.shape_cast %4 : vector<1x1x128xf32> to vector<1x128xf32>
    %cst = arith.constant 0.282094806 : f32
    %6 = vector.broadcast %cst : f32 to vector<1x128xf32>
    %c0_6 = arith.constant 0 : index
    %c0_7 = arith.constant 0 : index
    %c0_8 = arith.constant 0 : index
    %7 = vector.load %arg2[%c0_6, %c0_7, %c0_8] : memref<16x1x128xf32, #tpu.memory_space<vmem>>, vector<1x1x128xf32>
    %8 = vector.shape_cast %7 : vector<1x1x128xf32> to vector<1x128xf32>
    %9 = vector.shape_cast %6 : vector<1x128xf32> to vector<1x1x128xf32>
    tpu.vector_store %arg2[%c0_6, %c0_7, %c0_8], %9 {strides = array<i32>} : memref<16x1x128xf32, #tpu.memory_space<vmem>>, vector<1x1x128xf32>,
    %cst_9 = arith.constant -0.488602519 : f32
    %10 = vector.broadcast %cst_9 : f32 to vector<1x128xf32>
    %11 = arith.mulf %10, %3 : vector<1x128xf32>
    %c1_10 = arith.constant 1 : index
    %c0_11 = arith.constant 0 : index
    %c0_12 = arith.constant 0 : index
    %12 = vector.load %arg2[%c1_10, %c0_11, %c0_12] : memref<16x1x128xf32, #tpu.memory_space<vmem>>, vector<1x1x128xf32>
    %13 = vector.shape_cast %12 : vector<1x1x128xf32> to vector<1x128xf32>
    %14 = vector.shape_cast %11 : vector<1x128xf32> to vector<1x1x128xf32>
    tpu.vector_store %arg2[%c1_10, %c0_11, %c0_12], %14 {strides = array<i32>} : memref<16x1x128xf32, #tpu.memory_space<vmem>>, vector<1x1x128xf32>,
    %cst_13 = arith.constant 0.488602519 : f32
    %15 = vector.broadcast %cst_13 : f32 to vector<1x128xf32>
    %16 = arith.mulf %15, %5 : vector<1x128xf32>
    %c2_14 = arith.constant 2 : index
    %c0_15 = arith.constant 0 : index
    %c0_16 = arith.constant 0 : index
    %17 = vector.load %arg2[%c2_14, %c0_15, %c0_16] : memref<16x1x128xf32, #tpu.memory_space<vmem>>, vector<1x1x128xf32>
    %18 = vector.shape_cast %17 : vector<1x1x128xf32> to vector<1x128xf32>
    %19 = vector.shape_cast %16 : vector<1x128xf32> to vector<1x1x128xf32>
    tpu.vector_store %arg2[%c2_14, %c0_15, %c0_16], %19 {strides = array<i32>} : memref<16x1x128xf32, #tpu.memory_space<vmem>>, vector<1x1x128xf32>,
    %cst_17 = arith.constant -0.488602519 : f32
    %20 = vector.broadcast %cst_17 : f32 to vector<1x128xf32>
    %21 = arith.mulf %20, %1 : vector<1x128xf32>
    %c3 = arith.constant 3 : index
    %c0_18 = arith.constant 0 : index
    %c0_19 = arith.constant 0 : index
    %22 = vector.load %arg2[%c3, %c0_18, %c0_19] : memref<16x1x128xf32, #tpu.memory_space<vmem>>, vector<1x1x128xf32>
    %23 = vector.shape_cast %22 : vector<1x1x128xf32> to vector<1x128xf32>
    %24 = vector.shape_cast %21 : vector<1x128xf32> to vector<1x1x128xf32>
    tpu.vector_store %arg2[%c3, %c0_18, %c0_19], %24 {strides = array<i32>} : memref<16x1x128xf32, #tpu.memory_space<vmem>>, vector<1x1x128xf32>,
    %25 = arith.mulf %1, %1 : vector<1x128xf32>
    %26 = arith.mulf %3, %3 : vector<1x128xf32>
    %27 = arith.mulf %5, %5 : vector<1x128xf32>
    %28 = arith.mulf %1, %3 : vector<1x128xf32>
    %29 = arith.mulf %3, %5 : vector<1x128xf32>
    %30 = arith.mulf %1, %5 : vector<1x128xf32>
    %cst_20 = arith.constant 1.09254849 : f32
    %31 = vector.broadcast %cst_20 : f32 to vector<1x128xf32>
    %32 = arith.mulf %31, %28 : vector<1x128xf32>
    %c4 = arith.constant 4 : index
    %c0_21 = arith.constant 0 : index
    %c0_22 = arith.constant 0 : index
    %33 = vector.load %arg2[%c4, %c0_21, %c0_22] : memref<16x1x128xf32, #tpu.memory_space<vmem>>, vector<1x1x128xf32>
    %34 = vector.shape_cast %33 : vector<1x1x128xf32> to vector<1x128xf32>
    %35 = vector.shape_cast %32 : vector<1x128xf32> to vector<1x1x128xf32>
    tpu.vector_store %arg2[%c4, %c0_21, %c0_22], %35 {strides = array<i32>} : memref<16x1x128xf32, #tpu.memory_space<vmem>>, vector<1x1x128xf32>,
    %cst_23 = arith.constant -1.09254849 : f32
    %36 = vector.broadcast %cst_23 : f32 to vector<1x128xf32>
    %37 = arith.mulf %36, %29 : vector<1x128xf32>
    %c5 = arith.constant 5 : index
    %c0_24 = arith.constant 0 : index
    %c0_25 = arith.constant 0 : index
    %38 = vector.load %arg2[%c5, %c0_24, %c0_25] : memref<16x1x128xf32, #tpu.memory_space<vmem>>, vector<1x1x128xf32>
    %39 = vector.shape_cast %38 : vector<1x1x128xf32> to vector<1x128xf32>
    %40 = vector.shape_cast %37 : vector<1x128xf32> to vector<1x1x128xf32>
    tpu.vector_store %arg2[%c5, %c0_24, %c0_25], %40 {strides = array<i32>} : memref<16x1x128xf32, #tpu.memory_space<vmem>>, vector<1x1x128xf32>,
    %cst_26 = arith.constant 0.946174681 : f32
    %41 = vector.broadcast %cst_26 : f32 to vector<1x128xf32>
    %42 = arith.mulf %41, %27 : vector<1x128xf32>
    %cst_27 = arith.constant 0.31539157 : f32
    %43 = vector.broadcast %cst_27 : f32 to vector<1x128xf32>
    %44 = arith.subf %42, %43 : vector<1x128xf32>
    %c6 = arith.constant 6 : index
    %c0_28 = arith.constant 0 : index
    %c0_29 = arith.constant 0 : index
    %45 = vector.load %arg2[%c6, %c0_28, %c0_29] : memref<16x1x128xf32, #tpu.memory_space<vmem>>, vector<1x1x128xf32>
    %46 = vector.shape_cast %45 : vector<1x1x128xf32> to vector<1x128xf32>
    %47 = vector.shape_cast %44 : vector<1x128xf32> to vector<1x1x128xf32>
    tpu.vector_store %arg2[%c6, %c0_28, %c0_29], %47 {strides = array<i32>} : memref<16x1x128xf32, #tpu.memory_space<vmem>>, vector<1x1x128xf32>,
    %cst_30 = arith.constant -1.09254849 : f32
    %48 = vector.broadcast %cst_30 : f32 to vector<1x128xf32>
    %49 = arith.mulf %48, %30 : vector<1x128xf32>
    %c7 = arith.constant 7 : index
    %c0_31 = arith.constant 0 : index
    %c0_32 = arith.constant 0 : index
    %50 = vector.load %arg2[%c7, %c0_31, %c0_32] : memref<16x1x128xf32, #tpu.memory_space<vmem>>, vector<1x1x128xf32>
    %51 = vector.shape_cast %50 : vector<1x1x128xf32> to vector<1x128xf32>
    %52 = vector.shape_cast %49 : vector<1x128xf32> to vector<1x1x128xf32>
    tpu.vector_store %arg2[%c7, %c0_31, %c0_32], %52 {strides = array<i32>} : memref<16x1x128xf32, #tpu.memory_space<vmem>>, vector<1x1x128xf32>,
    %cst_33 = arith.constant 0.546274245 : f32
    %53 = vector.broadcast %cst_33 : f32 to vector<1x128xf32>
    %54 = arith.mulf %53, %25 : vector<1x128xf32>
    %cst_34 = arith.constant 0.546274245 : f32
    %55 = vector.broadcast %cst_34 : f32 to vector<1x128xf32>
    %56 = arith.mulf %55, %26 : vector<1x128xf32>
    %57 = arith.subf %54, %56 : vector<1x128xf32>
    %c8 = arith.constant 8 : index
    %c0_35 = arith.constant 0 : index
    %c0_36 = arith.constant 0 : index
    %58 = vector.load %arg2[%c8, %c0_35, %c0_36] : memref<16x1x128xf32, #tpu.memory_space<vmem>>, vector<1x1x128xf32>
    %59 = vector.shape_cast %58 : vector<1x1x128xf32> to vector<1x128xf32>
    %60 = vector.shape_cast %57 : vector<1x128xf32> to vector<1x1x128xf32>
    tpu.vector_store %arg2[%c8, %c0_35, %c0_36], %60 {strides = array<i32>} : memref<16x1x128xf32, #tpu.memory_space<vmem>>, vector<1x1x128xf32>,
    %cst_37 = arith.constant 0.590043604 : f32
    %61 = vector.broadcast %cst_37 : f32 to vector<1x128xf32>
    %62 = arith.mulf %61, %3 : vector<1x128xf32>
    %cst_38 = arith.constant -3.000000e+00 : f32
    %63 = vector.broadcast %cst_38 : f32 to vector<1x128xf32>
    %64 = arith.mulf %63, %25 : vector<1x128xf32>
    %65 = arith.addf %64, %26 : vector<1x128xf32>
    %66 = arith.mulf %62, %65 : vector<1x128xf32>
    %c9 = arith.constant 9 : index
    %c0_39 = arith.constant 0 : index
    %c0_40 = arith.constant 0 : index
    %67 = vector.load %arg2[%c9, %c0_39, %c0_40] : memref<16x1x128xf32, #tpu.memory_space<vmem>>, vector<1x1x128xf32>
    %68 = vector.shape_cast %67 : vector<1x1x128xf32> to vector<1x128xf32>
    %69 = vector.shape_cast %66 : vector<1x128xf32> to vector<1x1x128xf32>
    tpu.vector_store %arg2[%c9, %c0_39, %c0_40], %69 {strides = array<i32>} : memref<16x1x128xf32, #tpu.memory_space<vmem>>, vector<1x1x128xf32>,
    %cst_41 = arith.constant 2.89061141 : f32
    %70 = vector.broadcast %cst_41 : f32 to vector<1x128xf32>
    %71 = arith.mulf %70, %28 : vector<1x128xf32>
    %72 = arith.mulf %71, %5 : vector<1x128xf32>
    %c10 = arith.constant 10 : index
    %c0_42 = arith.constant 0 : index
    %c0_43 = arith.constant 0 : index
    %73 = vector.load %arg2[%c10, %c0_42, %c0_43] : memref<16x1x128xf32, #tpu.memory_space<vmem>>, vector<1x1x128xf32>
    %74 = vector.shape_cast %73 : vector<1x1x128xf32> to vector<1x128xf32>
    %75 = vector.shape_cast %72 : vector<1x128xf32> to vector<1x1x128xf32>
    tpu.vector_store %arg2[%c10, %c0_42, %c0_43], %75 {strides = array<i32>} : memref<16x1x128xf32, #tpu.memory_space<vmem>>, vector<1x1x128xf32>,
    %cst_44 = arith.constant 0.457045794 : f32
    %76 = vector.broadcast %cst_44 : f32 to vector<1x128xf32>
    %77 = arith.mulf %76, %3 : vector<1x128xf32>
    %cst_45 = arith.constant 5.000000e+00 : f32
    %78 = vector.broadcast %cst_45 : f32 to vector<1x128xf32>
    %79 = arith.mulf %78, %27 : vector<1x128xf32>
    %cst_46 = arith.constant 1.000000e+00 : f32
    %80 = vector.broadcast %cst_46 : f32 to vector<1x128xf32>
    %81 = arith.subf %80, %79 : vector<1x128xf32>
    %82 = arith.mulf %77, %81 : vector<1x128xf32>
    %c11 = arith.constant 11 : index
    %c0_47 = arith.constant 0 : index
    %c0_48 = arith.constant 0 : index
    %83 = vector.load %arg2[%c11, %c0_47, %c0_48] : memref<16x1x128xf32, #tpu.memory_space<vmem>>, vector<1x1x128xf32>
    %84 = vector.shape_cast %83 : vector<1x1x128xf32> to vector<1x128xf32>
    %85 = vector.shape_cast %82 : vector<1x128xf32> to vector<1x1x128xf32>
    tpu.vector_store %arg2[%c11, %c0_47, %c0_48], %85 {strides = array<i32>} : memref<16x1x128xf32, #tpu.memory_space<vmem>>, vector<1x1x128xf32>,
    %cst_49 = arith.constant 0.373176336 : f32
    %86 = vector.broadcast %cst_49 : f32 to vector<1x128xf32>
    %87 = arith.mulf %86, %5 : vector<1x128xf32>
    %cst_50 = arith.constant 5.000000e+00 : f32
    %88 = vector.broadcast %cst_50 : f32 to vector<1x128xf32>
    %89 = arith.mulf %88, %27 : vector<1x128xf32>
    %cst_51 = arith.constant 3.000000e+00 : f32
    %90 = vector.broadcast %cst_51 : f32 to vector<1x128xf32>
    %91 = arith.subf %89, %90 : vector<1x128xf32>
    %92 = arith.mulf %87, %91 : vector<1x128xf32>
    %c12 = arith.constant 12 : index
    %c0_52 = arith.constant 0 : index
    %c0_53 = arith.constant 0 : index
    %93 = vector.load %arg2[%c12, %c0_52, %c0_53] : memref<16x1x128xf32, #tpu.memory_space<vmem>>, vector<1x1x128xf32>
    %94 = vector.shape_cast %93 : vector<1x1x128xf32> to vector<1x128xf32>
    %95 = vector.shape_cast %92 : vector<1x128xf32> to vector<1x1x128xf32>
    tpu.vector_store %arg2[%c12, %c0_52, %c0_53], %95 {strides = array<i32>} : memref<16x1x128xf32, #tpu.memory_space<vmem>>, vector<1x1x128xf32>,
    %cst_54 = arith.constant 0.457045794 : f32
    %96 = vector.broadcast %cst_54 : f32 to vector<1x128xf32>
    %97 = arith.mulf %96, %1 : vector<1x128xf32>
    %cst_55 = arith.constant 5.000000e+00 : f32
    %98 = vector.broadcast %cst_55 : f32 to vector<1x128xf32>
    %99 = arith.mulf %98, %27 : vector<1x128xf32>
    %cst_56 = arith.constant 1.000000e+00 : f32
    %100 = vector.broadcast %cst_56 : f32 to vector<1x128xf32>
    %101 = arith.subf %100, %99 : vector<1x128xf32>
    %102 = arith.mulf %97, %101 : vector<1x128xf32>
    %c13 = arith.constant 13 : index
    %c0_57 = arith.constant 0 : index
    %c0_58 = arith.constant 0 : index
    %103 = vector.load %arg2[%c13, %c0_57, %c0_58] : memref<16x1x128xf32, #tpu.memory_space<vmem>>, vector<1x1x128xf32>
    %104 = vector.shape_cast %103 : vector<1x1x128xf32> to vector<1x128xf32>
    %105 = vector.shape_cast %102 : vector<1x128xf32> to vector<1x1x128xf32>
    tpu.vector_store %arg2[%c13, %c0_57, %c0_58], %105 {strides = array<i32>} : memref<16x1x128xf32, #tpu.memory_space<vmem>>, vector<1x1x128xf32>,
    %cst_59 = arith.constant 1.44530571 : f32
    %106 = vector.broadcast %cst_59 : f32 to vector<1x128xf32>
    %107 = arith.mulf %106, %5 : vector<1x128xf32>
    %108 = arith.subf %25, %26 : vector<1x128xf32>
    %109 = arith.mulf %107, %108 : vector<1x128xf32>
    %c14 = arith.constant 14 : index
    %c0_60 = arith.constant 0 : index
    %c0_61 = arith.constant 0 : index
    %110 = vector.load %arg2[%c14, %c0_60, %c0_61] : memref<16x1x128xf32, #tpu.memory_space<vmem>>, vector<1x1x128xf32>
    %111 = vector.shape_cast %110 : vector<1x1x128xf32> to vector<1x128xf32>
    %112 = vector.shape_cast %109 : vector<1x128xf32> to vector<1x1x128xf32>
    tpu.vector_store %arg2[%c14, %c0_60, %c0_61], %112 {strides = array<i32>} : memref<16x1x128xf32, #tpu.memory_space<vmem>>, vector<1x1x128xf32>,
    %cst_62 = arith.constant 0.590043604 : f32
    %113 = vector.broadcast %cst_62 : f32 to vector<1x128xf32>
    %114 = arith.mulf %113, %1 : vector<1x128xf32>
    %cst_63 = arith.constant 0.000000e+00 : f32
    %115 = vector.broadcast %cst_63 : f32 to vector<1x128xf32>
    %116 = arith.subf %115, %25 : vector<1x128xf32>
    %cst_64 = arith.constant 3.000000e+00 : f32
    %117 = vector.broadcast %cst_64 : f32 to vector<1x128xf32>
    %118 = arith.mulf %117, %26 : vector<1x128xf32>
    %119 = arith.addf %116, %118 : vector<1x128xf32>
    %120 = arith.mulf %114, %119 : vector<1x128xf32>
    %c15 = arith.constant 15 : index
    %c0_65 = arith.constant 0 : index
    %c0_66 = arith.constant 0 : index
    %121 = vector.load %arg2[%c15, %c0_65, %c0_66] : memref<16x1x128xf32, #tpu.memory_space<vmem>>, vector<1x1x128xf32>
    %122 = vector.shape_cast %121 : vector<1x1x128xf32> to vector<1x128xf32>
    %123 = vector.shape_cast %120 : vector<1x128xf32> to vector<1x1x128xf32>
    tpu.vector_store %arg2[%c15, %c0_65, %c0_66], %123 {strides = array<i32>} : memref<16x1x128xf32, #tpu.memory_space<vmem>>, vector<1x1x128xf32>,
    return
  }
  func.func @transform_0(%arg0: i32) -> (i32, i32, i32) {
    %c0_i32 = arith.constant 0 : i32
    %c0_i32_0 = arith.constant 0 : i32
    %c0_i32_1 = arith.constant 0 : i32
    return %c0_i32, %arg0, %c0_i32_0 : i32, i32, i32
  }
  func.func @transform_1(%arg0: i32) -> (i32, i32, i32) {
    %c0_i32 = arith.constant 0 : i32
    %c0_i32_0 = arith.constant 0 : i32
    %c0_i32_1 = arith.constant 0 : i32
    return %c0_i32, %arg0, %c0_i32_0 : i32, i32, i32
  }
}

</mosaic_0001>

<llo_original>
// kernel: tpu_custom_call.1
$region0: #{tpu_custom_call.1}
  #allocation0 [shape = 'u32[]', space=smem, size = 0x4, offset = 0x4, fixed_abs, tag = 'smem constant byte address 0x4 - core index']
  #allocation1 [shape = 'u32[144,128]{1,0:T(1,128)}', space=vmem, size = 0x12000, scoped, tag = 'internal scratch']
  %s0 = inlined_call_operand.hbm [shape: f32[3,1,128], index: 0, kind: input, shape index: {}]
  %s1 = inlined_call_operand.hbm [shape: f32[16,1,128], index: 1, kind: output, shape index: {}]
  %s2 = sld [smem:[#allocation0]]
  $region18: #{tpu_custom_call.1} parent=0
    _
  %s4 = ssub.s32 1, %s2
  %s5 = scalar_select 0, %s4, %s2
  $region1: #{tpu_custom_call.1} parent=0
    #allocation2 [shape = 'u8[1536]{0}', space=vmem, size = 0x800, scoped, tag = 'input window, operand 0, single buffered']
    #allocation3 [shape = 's32[1]{0}', space=sflag, size = 0x4, scoped, tag = 'scoped memory for tpu_custom_call.1']
    #allocation4 [shape = 's32[1]{0}', space=sflag, size = 0x4, scoped, tag = 'scoped memory for tpu_custom_call.1']
    #allocation5 [shape = 'u8[8192]{0}', space=vmem, size = 0x2000, scoped, tag = 'output window, operand 0, single buffered']
    %6 = vsyncpa [#allocation3], 0
    %7 = vsyncpa [#allocation4], 0
    // Predicated region
    $region2: #{tpu_custom_call.1} parent=1 // pred_check
      _
    $region3: #{tpu_custom_call.1} parent=1 // pred_check_branch
      %9 = sbr.rel (0) target = $region5
    $region4: #{tpu_custom_call.1} parent=1 // pred_region
      %s11 = ssub.s32 48, 48
      %12 = vsyncadd [#allocation3], %s11
      %s13 = sshll.u32 [#allocation2], 4
      %s14 = int_to_ptr.vmem [resolvable:$true] %s13
      %19 = dma.hbm_to_vmem [thread:$0]  %s0, 48, %s14, [#allocation3], 16, 16, 1
    $region5: #{tpu_custom_call.1} parent=1 // pred_fallthru
      _
    // Predicated region
    $region6: #{tpu_custom_call.1} parent=1 // pred_check
      _
    $region7: #{tpu_custom_call.1} parent=1 // pred_check_branch
      %21 = sbr.rel (0) target = $region9
    $region8: #{tpu_custom_call.1} parent=1 // pred_region
      %22 = dma.done [#allocation3], 48
    $region9: #{tpu_custom_call.1} parent=1 // pred_fallthru
      _
    %v23 = vld [vmem:[#allocation2] sm:$0x1]
    %s24 = scalar_lea.vmem [#allocation2], 1
    %v25 = vld [vmem:[%s24] sm:$0x1]
    %s26 = scalar_lea.vmem [#allocation2], 2
    %v27 = vld [vmem:[%s26] sm:$0x1]
    %28 = vst [vmem:[#allocation5] sm:$0x1] 0.2820948
    %v29 = vmul.f32 %v25, -0.48860252
    %s30 = scalar_lea.vmem [#allocation5], 1
    %31 = vst [vmem:[%s30] sm:$0x1] %v29
    %v32 = vmul.f32 %v27, 0.48860252
    %s33 = scalar_lea.vmem [#allocation5], 2
    %34 = vst [vmem:[%s33] sm:$0x1] %v32
    %v35 = vmul.f32 %v23, -0.48860252
    %s36 = scalar_lea.vmem [#allocation5], 3
    %37 = vst [vmem:[%s36] sm:$0x1] %v35
    %v38 = vmul.f32 %v23, %v23
    %v39 = vmul.f32 %v25, %v25
    %v40 = vmul.f32 %v27, %v27
    %v41 = vmul.f32 %v23, %v25
    %v42 = vmul.f32 %v25, %v27
    %v43 = vmul.f32 %v23, %v27
    %v44 = vmul.f32 %v41, 1.0925485
    %s45 = scalar_lea.vmem [#allocation5], 4
    %46 = vst [vmem:[%s45] sm:$0x1] %v44
    %v47 = vmul.f32 %v42, -1.0925485
    %s48 = scalar_lea.vmem [#allocation5], 5
    %49 = vst [vmem:[%s48] sm:$0x1] %v47
    %v50 = vmul.f32 %v40, 0.9461747
    %v51 = vsub.f32 %v50, 0.31539157
    %s52 = scalar_lea.vmem [#allocation5], 6
    %53 = vst [vmem:[%s52] sm:$0x1] %v51
    %v54 = vmul.f32 %v43, -1.0925485
    %s55 = scalar_lea.vmem [#allocation5], 7
    %56 = vst [vmem:[%s55] sm:$0x1] %v54
    %v57 = vmul.f32 %v38, 0.54627424
    %v58 = vmul.f32 %v39, 0.54627424
    %v59 = vsub.f32 %v57, %v58
    %s60 = scalar_lea.vmem [#allocation5], 8
    %61 = vst [vmem:[%s60] sm:$0x1] %v59
    %v62 = vmul.f32 %v25, 0.5900436
    %v63 = vmul.f32 %v38, -3.0
    %v64 = vadd.f32 %v63, %v39
    %v65 = vmul.f32 %v62, %v64
    %s66 = scalar_lea.vmem [#allocation5], 9
    %67 = vst [vmem:[%s66] sm:$0x1] %v65
    %v68 = vmul.f32 %v41, 2.8906114
    %v69 = vmul.f32 %v68, %v27
    %s70 = scalar_lea.vmem [#allocation5], 10
    %71 = vst [vmem:[%s70] sm:$0x1] %v69
    %v72 = vmul.f32 %v25, 0.4570458
    %v73 = vmul.f32 %v40, 5.0
    %v74 = vsub.f32 1.0, %v73
    %v75 = vmul.f32 %v72, %v74
    %s76 = scalar_lea.vmem [#allocation5], 11
    %77 = vst [vmem:[%s76] sm:$0x1] %v75
    %v78 = vmul.f32 %v27, 0.37317634
    %v79 = vsub.f32 %v73, 3.0
    %v80 = vmul.f32 %v78, %v79
    %s81 = scalar_lea.vmem [#allocation5], 12
    %82 = vst [vmem:[%s81] sm:$0x1] %v80
    %v83 = vmul.f32 %v23, 0.4570458
    %v84 = vmul.f32 %v83, %v74
    %s85 = scalar_lea.vmem [#allocation5], 13
    %86 = vst [vmem:[%s85] sm:$0x1] %v84
    %v87 = vmul.f32 %v27, 1.4453057
    %v88 = vsub.f32 %v38, %v39
    %v89 = vmul.f32 %v87, %v88
    %s90 = scalar_lea.vmem [#allocation5], 14
    %91 = vst [vmem:[%s90] sm:$0x1] %v89
    %v92 = vmul.f32 %v23, 0.5900436
    %v93 = vsub.f32 0.0, %v38
    %v94 = vmul.f32 %v39, 3.0
    %v95 = vadd.f32 %v93, %v94
    %v96 = vmul.f32 %v92, %v95
    %s97 = scalar_lea.vmem [#allocation5], 15
    %98 = vst [vmem:[%s97] sm:$0x1] %v96
    // Predicated region
    $region10: #{tpu_custom_call.1} parent=1 // pred_check
      _
    $region11: #{tpu_custom_call.1} parent=1 // pred_check_branch
      %100 = sbr.rel (0) target = $region13
    $region12: #{tpu_custom_call.1} parent=1 // pred_region
      %s102 = ssub.s32 256, 256
      %103 = vsyncadd [#allocation4], %s102
      %s104 = sshll.u32 [#allocation5], 4
      %s105 = int_to_ptr.vmem [resolvable:$true] %s104
      %110 = dma.vmem_to_hbm [thread:$0]  %s105, 256, %s1, [#allocation4], 16, 16, 1
    $region13: #{tpu_custom_call.1} parent=1 // pred_fallthru
      _
    // Predicated region
    $region14: #{tpu_custom_call.1} parent=1 // pred_check
      _
    $region15: #{tpu_custom_call.1} parent=1 // pred_check_branch
      %112 = sbr.rel (0) target = $region17
    $region16: #{tpu_custom_call.1} parent=1 // pred_region
      %113 = dma.done [#allocation4], 256
    $region17: #{tpu_custom_call.1} parent=1 // pred_fallthru
      _
    %114 = vsyncpa [#allocation3], 1
    %115 = vsyncpa [#allocation4], 1

</llo_original>
